<compile_context>
chip_gen: v7x
topology: tpu7x:2x2x1
jax: 0.10.0
libtpu: 0.0.40
codegen_flags: <defaults>
</compile_context>

<pallas_src>
import jax
import jax.numpy as jnp
from jax.experimental import pallas as pl
from jax.experimental.pallas import tpu as pltpu

MAX_INFLIGHT_DMAS = 16        # row DMAs kept in flight on the HBM-gather path
ROW_BLK_CAP = 128             # rows per grid step when B is large (multiple of 8)
FAST_PATH_VMEM_BUDGET = 40 << 20   # conservative: fits v7x's 64 MiB physical VMEM


# ----------------------------------------------------------------------------
# Fast path: whole table resident in VMEM, gather via dynamic row slices.
# ----------------------------------------------------------------------------
def class_embed_vmem_gather_kernel(ids_ref, table_ref, out_ref):
    """ids_ref: SMEM (B_pad,) int32 (scalar prefetch)
       table_ref: VMEM (n_classes, D)  -- staged once (constant index_map)
       out_ref: VMEM (row_blk, D)      -- pipelined output block"""
    i = pl.program_id(0)
    row_blk = out_ref.shape[0]
    for b in range(row_blk):
        idx = ids_ref[i * row_blk + b]                      # scalar id from SMEM
        out_ref[pl.ds(b, 1), :] = table_ref[pl.ds(idx, 1), :]   # exact in-VMEM copy


# ----------------------------------------------------------------------------
# Fallback path: table in HBM, manual DMA gather straight into out_ref.
# ----------------------------------------------------------------------------
def class_embed_hbm_gather_kernel(ids_ref, table_hbm, out_ref, sems):
    """ids_ref: SMEM (B_pad,) int32 (scalar prefetch)
       table_hbm: HBM (n_classes, D)  (memory_space=pl.ANY, no auto-DMA)
       out_ref: VMEM (row_blk, D)     (DMA target; no intermediate row_buf)
       sems: DMA semaphores (n_inflight,)"""
    i = pl.program_id(0)
    row_blk = out_ref.shape[0]
    n_inflight = min(MAX_INFLIGHT_DMAS, row_blk)

    def start_copy(b, idx):
        cp = pltpu.make_async_copy(
            table_hbm.at[pl.ds(idx, 1), :],      # one HBM table row
            out_ref.at[pl.ds(b, 1), :],          # straight into the output block
            sems.at[b % n_inflight],
        )
        cp.start()
        return cp

    copies = [None] * row_blk
    # Prime the in-flight window.
    for b in range(n_inflight):
        copies[b] = start_copy(b, ids_ref[i * row_blk + b])

    # Retire in order while keeping the window full.
    for b in range(row_blk):
        nb = b + n_inflight
        # Read the next class id BEFORE the wait: DMA waits break SMEM
        # sst->sld forwarding and would stall this scalar load otherwise.
        next_idx = ids_ref[i * row_blk + nb] if nb < row_blk else None
        copies[b].wait()                          # same descriptor that was started
        if nb < row_blk:
            copies[nb] = start_copy(nb, next_idx)


# ----------------------------------------------------------------------------
# Wrapper / dispatch
# ----------------------------------------------------------------------------
def class_embedder_forward(class_ids, embedding_table, *,
                           row_blk_cap=ROW_BLK_CAP,
                           fast_path_vmem_budget=FAST_PATH_VMEM_BUDGET,
                           force_hbm_gather=False):
    """Pallas equivalent of ClassEmbedder.forward.

    class_ids       : (B,) integer array
    embedding_table : (n_classes, embed_dim)
    returns         : (B, 1, embed_dim)   (matches batch[key][:, None] -> Embedding)
    """
    B = class_ids.shape[0]
    n_classes, embed_dim = embedding_table.shape
    itemsize = jnp.dtype(embedding_table.dtype).itemsize

    # PyTorch nn.Embedding raises on OOB ids; TPU DMAs are not bounds-checked.
    # TODO(synk): int64 ids >= 2**31 would be truncated by the int32 cast.
    ids = jnp.clip(class_ids.astype(jnp.int32), 0, n_classes - 1)

    # Whole batch in one grid step when it fits; otherwise tile in row_blk
    # chunks (multiple of 8 so output blocks stay (8,128)-aligned).
    if B <= row_blk_cap:
        row_blk, num_blocks, B_pad = B, 1, B
    else:
        row_blk = row_blk_cap
        num_blocks = -(-B // row_blk)
        B_pad = num_blocks * row_blk
    if B_pad != B:
        ids = jnp.pad(ids, (0, B_pad - B))   # pad rows gather class 0, sliced off below

    # VMEM budget for the fast path (table double-buffered by the pipeline is
    # the worst case even though the index never changes).
    table_bytes = n_classes * embed_dim * itemsize
    out_block_bytes = row_blk * embed_dim * itemsize
    need_bytes = 2 * table_bytes + 2 * out_block_bytes + (2 << 20)
    use_fast_path = (not force_hbm_gather) and (need_bytes <= fast_path_vmem_budget)

    out_shape = jax.ShapeDtypeStruct((B_pad, embed_dim), embedding_table.dtype)

    if use_fast_path:
        # Explicit VMEM limit: v5e's default scoped VMEM is only 16 MiB, so
        # mid-size tables need this even though 128 MiB is physically there;
        # cap below v7x's 64 MiB physical VMEM.
        vmem_limit = int(min(max(need_bytes + (8 << 20), 32 << 20), 48 << 20))
        out = pl.pallas_call(
            class_embed_vmem_gather_kernel,
            out_shape=out_shape,
            grid_spec=pltpu.PrefetchScalarGridSpec(
                num_scalar_prefetch=1,
                grid=(num_blocks,),
                in_specs=[
                    # Constant index_map: the table is DMA'd HBM->VMEM once as a
                    # single bandwidth-bound copy and stays resident.
                    pl.BlockSpec((n_classes, embed_dim), lambda i, ids_sm: (0, 0)),
                ],
                out_specs=pl.BlockSpec((row_blk, embed_dim), lambda i, ids_sm: (i, 0)),
            ),
            compiler_params=pltpu.CompilerParams(
                dimension_semantics=("arbitrary",),
                vmem_limit_bytes=vmem_limit,
            ),
        )(ids, embedding_table)
    else:
        n_inflight = min(MAX_INFLIGHT_DMAS, row_blk)
        out = pl.pallas_call(
            class_embed_hbm_gather_kernel,
            out_shape=out_shape,
            grid_spec=pltpu.PrefetchScalarGridSpec(
                num_scalar_prefetch=1,
                grid=(num_blocks,),
                in_specs=[
                    # Table stays in HBM; only the selected rows are DMA'd.
                    pl.BlockSpec(memory_space=pl.ANY),
                ],
                out_specs=pl.BlockSpec((row_blk, embed_dim), lambda i, ids_sm: (i, 0)),
                scratch_shapes=[pltpu.SemaphoreType.DMA((n_inflight,))],
            ),
            # TODO(synk): on v7x with num_blocks >= 2, pltpu.CORE_PARALLEL on this
            # axis would shard blocks across the two TensorCores.
            compiler_params=pltpu.CompilerParams(
                dimension_semantics=("arbitrary",),
            ),
        )(ids, embedding_table)

    if B_pad != B:
        out = out[:B]
    # PyTorch does batch[key][:, None] before the lookup -> extra token axis.
    return out[:, None, :]


class ClassEmbedder:
    """Thin Python mirror of the nn.Module (parameters + dict-based forward)."""

    def __init__(self, embed_dim, n_classes=1000, key='class', rng=None):
        self.key = key
        rng = jax.random.PRNGKey(0) if rng is None else rng
        # nn.Embedding default init: N(0, 1)
        self.embedding = jax.random.normal(
            rng, (n_classes, embed_dim), dtype=jnp.float32
        )

    def __call__(self, batch, key=None):
        if key is None:
            key = self.key
        return class_embedder_forward(batch[key], self.embedding)


if __name__ == "__main__":
    embed_dim = 128
    n_classes = 1000
    batch_size = 8

    root = jax.random.PRNGKey(0)
    k_emb, k_ids = jax.random.split(root)

    embedder = ClassEmbedder(embed_dim, n_classes=n_classes, key='class', rng=k_emb)
    class_ids = jax.random.randint(k_ids, (batch_size,), 0, n_classes, dtype=jnp.int32)
    batch = {'class': class_ids}

    ref = embedder.embedding[class_ids][:, None, :]

    # Fast path: whole table staged into VMEM, in-VMEM row gather.
    out_fast = jax.block_until_ready(embedder(batch))
    assert out_fast.shape == (batch_size, 1, embed_dim), out_fast.shape
    assert out_fast.dtype == jnp.float32
    assert jnp.allclose(out_fast, ref), "fast path mismatch vs reference gather"

    # Fallback path: forced HBM row-gather (exercised for correctness).
    out_gather = jax.block_until_ready(
        class_embedder_forward(class_ids, embedder.embedding, force_hbm_gather=True))
    assert out_gather.shape == (batch_size, 1, embed_dim), out_gather.shape
    assert jnp.allclose(out_gather, ref), "HBM-gather path mismatch vs reference gather"

    print("KERNEL_OK")
</pallas_src>

<mosaic_0001>
module attributes {stable_mosaic.version = 11 : i64} {
  func.func @class_embed_vmem_gather_kernel(%arg0: i32, %arg1: memref<8xi32, #tpu.memory_space<smem>>, %arg2: memref<1000x128xf32, #tpu.memory_space<vmem>>, %arg3: memref<8x128xf32, #tpu.memory_space<vmem>>) attributes {dimension_semantics = [#tpu.dimension_semantics<arbitrary>], iteration_bounds = array<i64: 1>, scalar_prefetch = 1 : i64, scratch_operands = 0 : i64, tpu.core_type = #tpu.core_type<tc>, window_params = [{pipeline_mode = #tpu.pipeline_mode<synchronous>, transform_indices = @transform_0, window_bounds = array<i64: 1000, 128>}, {transform_indices = @transform_1, window_bounds = array<i64: 8, 128>}]} {
    %c8_i32 = arith.constant 8 : i32
    %0 = arith.muli %arg0, %c8_i32 : i32
    %c0_i32 = arith.constant 0 : i32
    %1 = arith.addi %0, %c0_i32 : i32
    %2 = arith.index_cast %1 : i32 to index
    %3 = memref.load %arg1[%2] : memref<8xi32, #tpu.memory_space<smem>>
    %4 = arith.index_cast %3 : i32 to index
    %c0 = arith.constant 0 : index
    %5 = vector.load %arg2[%4, %c0] : memref<1000x128xf32, #tpu.memory_space<vmem>>, vector<1x128xf32>
    %c0_0 = arith.constant 0 : index
    %c0_1 = arith.constant 0 : index
    %6 = vector.load %arg3[%c0_0, %c0_1] : memref<8x128xf32, #tpu.memory_space<vmem>>, vector<1x128xf32>
    tpu.vector_store %arg3[%c0_0, %c0_1], %5 {strides = array<i32>} : memref<8x128xf32, #tpu.memory_space<vmem>>, vector<1x128xf32>,
    %c8_i32_2 = arith.constant 8 : i32
    %7 = arith.muli %arg0, %c8_i32_2 : i32
    %c1_i32 = arith.constant 1 : i32
    %8 = arith.addi %7, %c1_i32 : i32
    %9 = arith.index_cast %8 : i32 to index
    %10 = memref.load %arg1[%9] : memref<8xi32, #tpu.memory_space<smem>>
    %11 = arith.index_cast %10 : i32 to index
    %c0_3 = arith.constant 0 : index
    %12 = vector.load %arg2[%11, %c0_3] : memref<1000x128xf32, #tpu.memory_space<vmem>>, vector<1x128xf32>
    %c1 = arith.constant 1 : index
    %c0_4 = arith.constant 0 : index
    %13 = vector.load %arg3[%c1, %c0_4] : memref<8x128xf32, #tpu.memory_space<vmem>>, vector<1x128xf32>
    tpu.vector_store %arg3[%c1, %c0_4], %12 {strides = array<i32>} : memref<8x128xf32, #tpu.memory_space<vmem>>, vector<1x128xf32>,
    %c8_i32_5 = arith.constant 8 : i32
    %14 = arith.muli %arg0, %c8_i32_5 : i32
    %c2_i32 = arith.constant 2 : i32
    %15 = arith.addi %14, %c2_i32 : i32
    %16 = arith.index_cast %15 : i32 to index
    %17 = memref.load %arg1[%16] : memref<8xi32, #tpu.memory_space<smem>>
    %18 = arith.index_cast %17 : i32 to index
    %c0_6 = arith.constant 0 : index
    %19 = vector.load %arg2[%18, %c0_6] : memref<1000x128xf32, #tpu.memory_space<vmem>>, vector<1x128xf32>
    %c2 = arith.constant 2 : index
    %c0_7 = arith.constant 0 : index
    %20 = vector.load %arg3[%c2, %c0_7] : memref<8x128xf32, #tpu.memory_space<vmem>>, vector<1x128xf32>
    tpu.vector_store %arg3[%c2, %c0_7], %19 {strides = array<i32>} : memref<8x128xf32, #tpu.memory_space<vmem>>, vector<1x128xf32>,
    %c8_i32_8 = arith.constant 8 : i32
    %21 = arith.muli %arg0, %c8_i32_8 : i32
    %c3_i32 = arith.constant 3 : i32
    %22 = arith.addi %21, %c3_i32 : i32
    %23 = arith.index_cast %22 : i32 to index
    %24 = memref.load %arg1[%23] : memref<8xi32, #tpu.memory_space<smem>>
    %25 = arith.index_cast %24 : i32 to index
    %c0_9 = arith.constant 0 : index
    %26 = vector.load %arg2[%25, %c0_9] : memref<1000x128xf32, #tpu.memory_space<vmem>>, vector<1x128xf32>
    %c3 = arith.constant 3 : index
    %c0_10 = arith.constant 0 : index
    %27 = vector.load %arg3[%c3, %c0_10] : memref<8x128xf32, #tpu.memory_space<vmem>>, vector<1x128xf32>
    tpu.vector_store %arg3[%c3, %c0_10], %26 {strides = array<i32>} : memref<8x128xf32, #tpu.memory_space<vmem>>, vector<1x128xf32>,
    %c8_i32_11 = arith.constant 8 : i32
    %28 = arith.muli %arg0, %c8_i32_11 : i32
    %c4_i32 = arith.constant 4 : i32
    %29 = arith.addi %28, %c4_i32 : i32
    %30 = arith.index_cast %29 : i32 to index
    %31 = memref.load %arg1[%30] : memref<8xi32, #tpu.memory_space<smem>>
    %32 = arith.index_cast %31 : i32 to index
    %c0_12 = arith.constant 0 : index
    %33 = vector.load %arg2[%32, %c0_12] : memref<1000x128xf32, #tpu.memory_space<vmem>>, vector<1x128xf32>
    %c4 = arith.constant 4 : index
    %c0_13 = arith.constant 0 : index
    %34 = vector.load %arg3[%c4, %c0_13] : memref<8x128xf32, #tpu.memory_space<vmem>>, vector<1x128xf32>
    tpu.vector_store %arg3[%c4, %c0_13], %33 {strides = array<i32>} : memref<8x128xf32, #tpu.memory_space<vmem>>, vector<1x128xf32>,
    %c8_i32_14 = arith.constant 8 : i32
    %35 = arith.muli %arg0, %c8_i32_14 : i32
    %c5_i32 = arith.constant 5 : i32
    %36 = arith.addi %35, %c5_i32 : i32
    %37 = arith.index_cast %36 : i32 to index
    %38 = memref.load %arg1[%37] : memref<8xi32, #tpu.memory_space<smem>>
    %39 = arith.index_cast %38 : i32 to index
    %c0_15 = arith.constant 0 : index
    %40 = vector.load %arg2[%39, %c0_15] : memref<1000x128xf32, #tpu.memory_space<vmem>>, vector<1x128xf32>
    %c5 = arith.constant 5 : index
    %c0_16 = arith.constant 0 : index
    %41 = vector.load %arg3[%c5, %c0_16] : memref<8x128xf32, #tpu.memory_space<vmem>>, vector<1x128xf32>
    tpu.vector_store %arg3[%c5, %c0_16], %40 {strides = array<i32>} : memref<8x128xf32, #tpu.memory_space<vmem>>, vector<1x128xf32>,
    %c8_i32_17 = arith.constant 8 : i32
    %42 = arith.muli %arg0, %c8_i32_17 : i32
    %c6_i32 = arith.constant 6 : i32
    %43 = arith.addi %42, %c6_i32 : i32
    %44 = arith.index_cast %43 : i32 to index
    %45 = memref.load %arg1[%44] : memref<8xi32, #tpu.memory_space<smem>>
    %46 = arith.index_cast %45 : i32 to index
    %c0_18 = arith.constant 0 : index
    %47 = vector.load %arg2[%46, %c0_18] : memref<1000x128xf32, #tpu.memory_space<vmem>>, vector<1x128xf32>
    %c6 = arith.constant 6 : index
    %c0_19 = arith.constant 0 : index
    %48 = vector.load %arg3[%c6, %c0_19] : memref<8x128xf32, #tpu.memory_space<vmem>>, vector<1x128xf32>
    tpu.vector_store %arg3[%c6, %c0_19], %47 {strides = array<i32>} : memref<8x128xf32, #tpu.memory_space<vmem>>, vector<1x128xf32>,
    %c8_i32_20 = arith.constant 8 : i32
    %49 = arith.muli %arg0, %c8_i32_20 : i32
    %c7_i32 = arith.constant 7 : i32
    %50 = arith.addi %49, %c7_i32 : i32
    %51 = arith.index_cast %50 : i32 to index
    %52 = memref.load %arg1[%51] : memref<8xi32, #tpu.memory_space<smem>>
    %53 = arith.index_cast %52 : i32 to index
    %c0_21 = arith.constant 0 : index
    %54 = vector.load %arg2[%53, %c0_21] : memref<1000x128xf32, #tpu.memory_space<vmem>>, vector<1x128xf32>
    %c7 = arith.constant 7 : index
    %c0_22 = arith.constant 0 : index
    %55 = vector.load %arg3[%c7, %c0_22] : memref<8x128xf32, #tpu.memory_space<vmem>>, vector<1x128xf32>
    tpu.vector_store %arg3[%c7, %c0_22], %54 {strides = array<i32>} : memref<8x128xf32, #tpu.memory_space<vmem>>, vector<1x128xf32>,
    return
  }
  func.func @transform_0(%arg0: i32, %arg1: memref<8xi32, #tpu.memory_space<smem>>) -> (i32, i32) {
    %c0_i32 = arith.constant 0 : i32
    %c0_i32_0 = arith.constant 0 : i32
    %c0_i32_1 = arith.constant 0 : i32
    return %c0_i32, %c0_i32_0 : i32, i32
  }
  func.func @transform_1(%arg0: i32, %arg1: memref<8xi32, #tpu.memory_space<smem>>) -> (i32, i32) {
    %c0_i32 = arith.constant 0 : i32
    %c0_i32_0 = arith.constant 0 : i32
    return %arg0, %c0_i32 : i32, i32
  }
}

</mosaic_0001>

<llo_original>
// kernel: tpu_custom_call.1
$region0: #{tpu_custom_call.1}
  #allocation0 [shape = 'u32[]', space=smem, size = 0x4, offset = 0x4, fixed_abs, tag = 'smem constant byte address 0x4 - core index']
  #allocation1 [shape = 'u32[144,128]{1,0:T(1,128)}', space=vmem, size = 0x12000, scoped, tag = 'internal scratch']
  #allocation2 [shape = 's32[1]{0}', space=sflag, size = 0x4, scoped, tag = 'scoped memory for tpu_custom_call.1']
  #allocation3 [shape = 'u8[512]{0}', space=smem, size = 0x200, scoped, tag = 'prefetched SMEM operand 0']
  %s0 = inlined_call_operand.hbm [shape: s32[8], index: 0, kind: input, shape index: {}]
  %s1 = inlined_call_operand.hbm [shape: f32[1000,128], index: 1, kind: input, shape index: {}]
  %s2 = inlined_call_operand.hbm [shape: f32[8,128], index: 2, kind: output, shape index: {}]
  %s3 = sld [smem:[#allocation0]]
  $region18: #{tpu_custom_call.1} parent=0
    _
  %s5 = ssub.s32 1, %s3
  %s6 = scalar_select 0, %s5, %s3
  %8 = dma.hbm_to_smem %s0, 16, [#allocation3], [#allocation2]
  %9 = dma.done [#allocation2], 16
  %10 = sfence
  $region1: #{tpu_custom_call.1} parent=0
    #allocation4 [shape = 'u8[512000]{0}', space=vmem, size = 0x7d000, scoped, tag = 'input window, operand 1, single buffered']
    #allocation5 [shape = 's32[1]{0}', space=sflag, size = 0x4, scoped, tag = 'scoped memory for tpu_custom_call.1']
    #allocation6 [shape = 's32[1]{0}', space=sflag, size = 0x4, scoped, tag = 'scoped memory for tpu_custom_call.1']
    #allocation7 [shape = 'u8[4096]{0}', space=vmem, size = 0x1000, scoped, tag = 'output window, operand 0, single buffered']
    %11 = vsyncpa [#allocation5], 0
    %12 = vsyncpa [#allocation6], 0
    // Predicated region
    $region2: #{tpu_custom_call.1} parent=1 // pred_check
      _
    $region3: #{tpu_custom_call.1} parent=1 // pred_check_branch
      %14 = sbr.rel (0) target = $region5
    $region4: #{tpu_custom_call.1} parent=1 // pred_region
      %s16 = ssub.s32 16000, 16000
      %17 = vsyncadd [#allocation5], %s16
      %s18 = sshll.u32 [#allocation4], 4
      %s19 = int_to_ptr.vmem [resolvable:$true] %s18
      %24 = dma.hbm_to_vmem [thread:$0]  %s1, 16000, %s19, [#allocation5], 128, 128, 8
    $region5: #{tpu_custom_call.1} parent=1 // pred_fallthru
      _
    // Predicated region
    $region6: #{tpu_custom_call.1} parent=1 // pred_check
      _
    $region7: #{tpu_custom_call.1} parent=1 // pred_check_branch
      %26 = sbr.rel (0) target = $region9
    $region8: #{tpu_custom_call.1} parent=1 // pred_region
      %27 = dma.done [#allocation5], 16000
    $region9: #{tpu_custom_call.1} parent=1 // pred_fallthru
      _
    %s28 = smul.u32 0, 8
    %s29 = sld [smem:[#allocation3 + %s28]]
    %s30 = scalar_lea.vmem [#allocation4], %s29
    %v31 = vld [vmem:[%s30] sm:$0x1]
    %32 = vst [vmem:[#allocation7] sm:$0x1] %v31
    %s33 = sadd.s32 %s28, 1
    %s34 = sld [smem:[#allocation3 + %s33]]
    %s35 = scalar_lea.vmem [#allocation4], %s34
    %v36 = vld [vmem:[%s35] sm:$0x1]
    %37 = vst [vmem:[#allocation7 + $0x1] sm:$0x1] %v36
    %s38 = sadd.s32 %s28, 2
    %s39 = sld [smem:[#allocation3 + %s38]]
    %s40 = scalar_lea.vmem [#allocation4], %s39
    %v41 = vld [vmem:[%s40] sm:$0x1]
    %42 = vst [vmem:[#allocation7 + $0x2] sm:$0x1] %v41
    %s43 = sadd.s32 %s28, 3
    %s44 = sld [smem:[#allocation3 + %s43]]
    %s45 = scalar_lea.vmem [#allocation4], %s44
    %v46 = vld [vmem:[%s45] sm:$0x1]
    %47 = vst [vmem:[#allocation7 + $0x3] sm:$0x1] %v46
    %s48 = sadd.s32 %s28, 4
    %s49 = sld [smem:[#allocation3 + %s48]]
    %s50 = scalar_lea.vmem [#allocation4], %s49
    %v51 = vld [vmem:[%s50] sm:$0x1]
    %52 = vst [vmem:[#allocation7 + $0x4] sm:$0x1] %v51
    %s53 = sadd.s32 %s28, 5
    %s54 = sld [smem:[#allocation3 + %s53]]
    %s55 = scalar_lea.vmem [#allocation4], %s54
    %v56 = vld [vmem:[%s55] sm:$0x1]
    %57 = vst [vmem:[#allocation7 + $0x5] sm:$0x1] %v56
    %s58 = sadd.s32 %s28, 6
    %s59 = sld [smem:[#allocation3 + %s58]]
    %s60 = scalar_lea.vmem [#allocation4], %s59
    %v61 = vld [vmem:[%s60] sm:$0x1]
    %62 = vst [vmem:[#allocation7 + $0x6] sm:$0x1] %v61
    %s63 = sadd.s32 %s28, 7
    %s64 = sld [smem:[#allocation3 + %s63]]
    %s65 = scalar_lea.vmem [#allocation4], %s64
    %v66 = vld [vmem:[%s65] sm:$0x1]
    %67 = vst [vmem:[#allocation7 + $0x7] sm:$0x1] %v66
    // Predicated region
    $region10: #{tpu_custom_call.1} parent=1 // pred_check
      _
    $region11: #{tpu_custom_call.1} parent=1 // pred_check_branch
      %69 = sbr.rel (0) target = $region13
    $region12: #{tpu_custom_call.1} parent=1 // pred_region
      %s71 = ssub.s32 128, 128
      %72 = vsyncadd [#allocation6], %s71
      %s74 = sshll.u32 [#allocation7], 4
      %s75 = int_to_ptr.vmem [resolvable:$true] %s74
      %77 = dma.vmem_to_hbm [thread:$0]  %s75, 128, %s2, [#allocation6]
    $region13: #{tpu_custom_call.1} parent=1 // pred_fallthru
      _
    // Predicated region
    $region14: #{tpu_custom_call.1} parent=1 // pred_check
      _
    $region15: #{tpu_custom_call.1} parent=1 // pred_check_branch
      %79 = sbr.rel (0) target = $region17
    $region16: #{tpu_custom_call.1} parent=1 // pred_region
      %80 = dma.done [#allocation6], 128
    $region17: #{tpu_custom_call.1} parent=1 // pred_fallthru
      _
    %81 = vsyncpa [#allocation5], 1
    %82 = vsyncpa [#allocation6], 1

</llo_original>
